<compile_context>
chip_gen: v7x
topology: tpu7x:2x2x1
jax: 0.10.0
libtpu: 0.0.40
codegen_flags: <defaults>
</compile_context>

<pallas_src>
import math

import jax
import jax.numpy as jnp
from jax import lax
from jax.experimental import pallas as pl
from jax.experimental.pallas import tpu as pltpu

IN_DIM, H1_DIM, H2_DIM, OUT_DIM = 11, 64, 32, 1

# Packed weight-slab layout (rows x 64 cols, 8-aligned row starts):
#   rows [ 0:11]            -> W1  (11, 64)
#   rows [16:80], cols[:32] -> W2  (64, 32)
#   row   80    , cols[:32] -> W3 as a row (32,)
_WP_ROWS = 88
# Packed bias slab (8, 128) f32:
#   row 0, cols[:64] -> b1 ; row 1, cols[:32] -> b2 ; row 2, col 0 -> b3


def _round_up(n, m):
    return ((n + m - 1) // m) * m


def mlp_kernel(x_ref, wp_ref, bp_ref, o_ref):
    cdt = x_ref.dtype
    x = x_ref[...]                                  # (TM, 11)  compute dtype

    # Static slices of the VMEM-resident parameter slabs.
    w1 = wp_ref[0:11, :]                            # (11, 64)
    w2 = wp_ref[16:80, 0:32]                        # (64, 32)
    w3_row = wp_ref[80:81, 0:32]                    # (1, 32)
    b1 = bp_ref[0:1, 0:64]                          # (1, 64)  f32
    b2 = bp_ref[1:2, 0:32]                          # (1, 32)  f32
    b3 = bp_ref[2:3, 0:1]                           # (1, 1)   f32

    # fc1 + ReLU  (f32 accumulate, f32 bias/ReLU)
    h1 = jnp.dot(x, w1, preferred_element_type=jnp.float32) + b1
    h1 = jnp.maximum(h1, 0.0).astype(cdt)           # (TM, 64)

    # fc2 + ReLU
    h2 = jnp.dot(h1, w2, preferred_element_type=jnp.float32) + b2
    h2 = jnp.maximum(h2, 0.0)                       # (TM, 32) f32

    # fc3: single output unit.  Contract h2's feature axis against the weight
    # row so the result is (1, TM): lane-dense (batch on lanes) -> unmasked
    # stores and a dense output DMA.
    w3_f32 = w3_row.astype(jnp.float32)             # (1, 32)
    y = lax.dot_general(w3_f32, h2, (((1,), (1,)), ((), ())),
                        preferred_element_type=jnp.float32)   # (1, TM)
    o_ref[...] = (y + b3).astype(o_ref.dtype)


def pack_params(params, compute_dtype):
    """Pack the 6 parameter tensors into one weight slab + one f32 bias slab."""
    w1, w2, w3 = params["w1"], params["w2"], params["w3"]
    b1, b2, b3 = params["b1"], params["b2"], params["b3"]

    wp = jnp.zeros((_WP_ROWS, 64), compute_dtype)
    wp = wp.at[0:11, :].set(w1.astype(compute_dtype))
    wp = wp.at[16:80, 0:32].set(w2.astype(compute_dtype))
    wp = wp.at[80, 0:32].set(w3[:, 0].astype(compute_dtype))

    bp = jnp.zeros((8, 128), jnp.float32)
    bp = bp.at[0, 0:64].set(b1.reshape(64).astype(jnp.float32))
    bp = bp.at[1, 0:32].set(b2.reshape(32).astype(jnp.float32))
    bp = bp.at[2, 0].set(b3.reshape(())[()].astype(jnp.float32))
    return wp, bp


def mlp_forward(x, params, *, compute_dtype=jnp.bfloat16, tm=None):
    """x: (B, 11) float32.  Returns (B, 1) float32."""
    B = x.shape[0]
    assert x.shape[1] == IN_DIM

    if tm is None:
        tm = min(4096, _round_up(max(B, 1), 128))   # big tiles amortize per-step overhead
    assert tm % 128 == 0, "tm must be a multiple of 128 (lane-dense output blocks)"

    B_pad = _round_up(B, tm)
    grid = B_pad // tm

    xk = x.astype(compute_dtype)
    if B_pad != B:
        xk = jnp.pad(xk, ((0, B_pad - B), (0, 0)))  # pad rows are zeros; outputs sliced off

    wp, bp = pack_params(params, compute_dtype)

    out_flat = pl.pallas_call(
        mlp_kernel,
        out_shape=jax.ShapeDtypeStruct((1, B_pad), jnp.float32),
        grid=(grid,),
        in_specs=[
            pl.BlockSpec((tm, IN_DIM), lambda i: (i, 0)),      # streamed batch tiles
            pl.BlockSpec((_WP_ROWS, 64), lambda i: (0, 0)),    # weights: VMEM-resident
            pl.BlockSpec((8, 128), lambda i: (0, 0)),          # biases:  VMEM-resident
        ],
        out_specs=pl.BlockSpec((1, tm), lambda i: (0, i)),     # lane-dense output slab
        compiler_params=pltpu.CompilerParams(
            dimension_semantics=("parallel",)),                # megacore sharding on v7x
    )(xk, wp, bp)

    return out_flat[0, :B].reshape(B, 1)


def init_params(key):
    """Deterministic init mimicking PyTorch nn.Linear defaults; stored (in, out)."""
    dims = [(IN_DIM, H1_DIM), (H1_DIM, H2_DIM), (H2_DIM, OUT_DIM)]
    params = {}
    for i, (fan_in, fan_out) in enumerate(dims, start=1):
        key, kw, kb = jax.random.split(key, 3)
        w_bound = math.sqrt(6.0 / fan_in)
        b_bound = 1.0 / math.sqrt(fan_in)
        params[f"w{i}"] = jax.random.uniform(
            kw, (fan_in, fan_out), jnp.float32, -w_bound, w_bound)
        params[f"b{i}"] = jax.random.uniform(
            kb, (1, fan_out), jnp.float32, -b_bound, b_bound)
    return params


def reference_forward(x, params, precision=lax.Precision.HIGHEST):
    h1 = jnp.maximum(jnp.dot(x, params["w1"], precision=precision) + params["b1"], 0.0)
    h2 = jnp.maximum(jnp.dot(h1, params["w2"], precision=precision) + params["b2"], 0.0)
    return jnp.dot(h2, params["w3"], precision=precision) + params["b3"]


if __name__ == "__main__":
    key = jax.random.PRNGKey(0)
    key, kx = jax.random.split(key)
    params = init_params(key)

    batch = 16
    x = jax.random.normal(kx, (batch, IN_DIM), dtype=jnp.float32)
    ref = reference_forward(x, params)

    # f32 path: exact forward semantics.
    out_f32 = jax.block_until_ready(mlp_forward(x, params, compute_dtype=jnp.float32))
    assert out_f32.shape == (batch, 1)
    assert jnp.allclose(out_f32, ref, atol=2e-3, rtol=2e-3)

    # bf16-input fast path (halved HBM traffic on v6e/v7x): looser tolerance.
    out_bf16 = jax.block_until_ready(mlp_forward(x, params, compute_dtype=jnp.bfloat16))
    assert out_bf16.shape == (batch, 1)
    assert jnp.allclose(out_bf16, ref, atol=5e-2, rtol=5e-2)

    # Multi-tile grid + batch padding path (grid > 1, B not divisible by tm).
    key, kx2 = jax.random.split(key)
    batch2 = 300
    x2 = jax.random.normal(kx2, (batch2, IN_DIM), dtype=jnp.float32)
    out2 = jax.block_until_ready(
        mlp_forward(x2, params, compute_dtype=jnp.float32, tm=128))
    ref2 = reference_forward(x2, params)
    assert out2.shape == (batch2, 1)
    assert jnp.allclose(out2, ref2, atol=2e-3, rtol=2e-3)

    print("KERNEL_OK")
</pallas_src>

<mosaic_0001>
module attributes {stable_mosaic.version = 11 : i64} {
  func.func @mlp_kernel(%arg0: i32, %arg1: memref<128x11xf32, #tpu.memory_space<vmem>>, %arg2: memref<88x64xf32, #tpu.memory_space<vmem>>, %arg3: memref<8x128xf32, #tpu.memory_space<vmem>>, %arg4: memref<1x128xf32, #tpu.memory_space<vmem>>) attributes {dimension_semantics = [#tpu.dimension_semantics<parallel>], iteration_bounds = array<i64: 1>, scalar_prefetch = 0 : i64, scratch_operands = 0 : i64, tpu.core_type = #tpu.core_type<tc>, window_params = [{transform_indices = @transform_0, window_bounds = array<i64: 128, 11>}, {pipeline_mode = #tpu.pipeline_mode<synchronous>, transform_indices = @transform_1, window_bounds = array<i64: 88, 64>}, {pipeline_mode = #tpu.pipeline_mode<synchronous>, transform_indices = @transform_2, window_bounds = array<i64: 8, 128>}, {transform_indices = @transform_3, window_bounds = array<i64: 1, 128>}]} {
    %c0 = arith.constant 0 : index
    %c0_0 = arith.constant 0 : index
    %0 = vector.load %arg1[%c0, %c0_0] : memref<128x11xf32, #tpu.memory_space<vmem>>, vector<128x11xf32>
    %c0_1 = arith.constant 0 : index
    %c0_2 = arith.constant 0 : index
    %1 = vector.load %arg2[%c0_1, %c0_2] : memref<88x64xf32, #tpu.memory_space<vmem>>, vector<11x64xf32>
    %c16 = arith.constant 16 : index
    %c0_3 = arith.constant 0 : index
    %2 = vector.load %arg2[%c16, %c0_3] : memref<88x64xf32, #tpu.memory_space<vmem>>, vector<64x32xf32>
    %c80 = arith.constant 80 : index
    %c0_4 = arith.constant 0 : index
    %3 = vector.load %arg2[%c80, %c0_4] : memref<88x64xf32, #tpu.memory_space<vmem>>, vector<1x32xf32>
    %c0_5 = arith.constant 0 : index
    %c0_6 = arith.constant 0 : index
    %4 = vector.load %arg3[%c0_5, %c0_6] : memref<8x128xf32, #tpu.memory_space<vmem>>, vector<1x64xf32>
    %c1 = arith.constant 1 : index
    %c0_7 = arith.constant 0 : index
    %5 = vector.load %arg3[%c1, %c0_7] : memref<8x128xf32, #tpu.memory_space<vmem>>, vector<1x32xf32>
    %c2 = arith.constant 2 : index
    %c0_8 = arith.constant 0 : index
    %6 = vector.load %arg3[%c2, %c0_8] : memref<8x128xf32, #tpu.memory_space<vmem>>, vector<1x1xf32>
    %cst = arith.constant dense<0.000000e+00> : vector<128x64xf32>
    %7 = tpu.matmul %0, %1, %cst {dimension_numbers = #tpu.dot_dimension_numbers<[1], [0], [0], [1], [0, 0, 1, 1], [], []>} : vector<128x11xf32>, vector<11x64xf32>, vector<128x64xf32> -> vector<128x64xf32>
    %8 = vector.broadcast %4 : vector<1x64xf32> to vector<128x64xf32>
    %9 = arith.addf %7, %8 : vector<128x64xf32>
    %cst_9 = arith.constant 0.000000e+00 : f32
    %10 = vector.broadcast %cst_9 : f32 to vector<128x64xf32>
    %11 = arith.maximumf %9, %10 : vector<128x64xf32>
    %cst_10 = arith.constant dense<0.000000e+00> : vector<128x32xf32>
    %12 = tpu.matmul %11, %2, %cst_10 {dimension_numbers = #tpu.dot_dimension_numbers<[1], [0], [0], [1], [0, 0, 1, 1], [], []>} : vector<128x64xf32>, vector<64x32xf32>, vector<128x32xf32> -> vector<128x32xf32>
    %13 = vector.broadcast %5 : vector<1x32xf32> to vector<128x32xf32>
    %14 = arith.addf %12, %13 : vector<128x32xf32>
    %cst_11 = arith.constant 0.000000e+00 : f32
    %15 = vector.broadcast %cst_11 : f32 to vector<128x32xf32>
    %16 = arith.maximumf %14, %15 : vector<128x32xf32>
    %cst_12 = arith.constant dense<0.000000e+00> : vector<1x128xf32>
    %17 = tpu.matmul %3, %16, %cst_12 {dimension_numbers = #tpu.dot_dimension_numbers<[1], [1], [0], [0], [0, 0, 1, 0], [], []>} : vector<1x32xf32>, vector<128x32xf32>, vector<1x128xf32> -> vector<1x128xf32>
    %18 = vector.broadcast %6 : vector<1x1xf32> to vector<1x128xf32>
    %19 = arith.addf %17, %18 : vector<1x128xf32>
    %c0_13 = arith.constant 0 : index
    %c0_14 = arith.constant 0 : index
    %20 = vector.load %arg4[%c0_13, %c0_14] : memref<1x128xf32, #tpu.memory_space<vmem>>, vector<1x128xf32>
    tpu.vector_store %arg4[%c0_13, %c0_14], %19 {strides = array<i32>} : memref<1x128xf32, #tpu.memory_space<vmem>>, vector<1x128xf32>,
    return
  }
  func.func @transform_0(%arg0: i32) -> (i32, i32) {
    %c0_i32 = arith.constant 0 : i32
    %c0_i32_0 = arith.constant 0 : i32
    return %arg0, %c0_i32 : i32, i32
  }
  func.func @transform_1(%arg0: i32) -> (i32, i32) {
    %c0_i32 = arith.constant 0 : i32
    %c0_i32_0 = arith.constant 0 : i32
    %c0_i32_1 = arith.constant 0 : i32
    return %c0_i32, %c0_i32_0 : i32, i32
  }
  func.func @transform_2(%arg0: i32) -> (i32, i32) {
    %c0_i32 = arith.constant 0 : i32
    %c0_i32_0 = arith.constant 0 : i32
    %c0_i32_1 = arith.constant 0 : i32
    return %c0_i32, %c0_i32_0 : i32, i32
  }
  func.func @transform_3(%arg0: i32) -> (i32, i32) {
    %c0_i32 = arith.constant 0 : i32
    %c0_i32_0 = arith.constant 0 : i32
    return %c0_i32, %arg0 : i32, i32
  }
}

</mosaic_0001>

<llo_original>
// kernel: tpu_custom_call.1
$region0: #{tpu_custom_call.1}
  #allocation0 [shape = 'u32[]', space=smem, size = 0x4, offset = 0x4, fixed_abs, tag = 'smem constant byte address 0x4 - core index']
  #allocation1 [shape = 'u32[144,128]{1,0:T(1,128)}', space=vmem, size = 0x12000, scoped, tag = 'internal scratch']
  %s0 = inlined_call_operand.vmem [shape: f32[128,11], index: 0, kind: input, shape index: {}]
  %s1 = inlined_call_operand.vmem [shape: f32[88,64], index: 1, kind: input, shape index: {}]
  %s2 = inlined_call_operand.vmem [shape: f32[8,128], index: 2, kind: input, shape index: {}]
  %s3 = inlined_call_operand.hbm [shape: f32[1,128], index: 3, kind: output, shape index: {}]
  %s4 = sld [smem:[#allocation0]]
  $region22: #{tpu_custom_call.1} parent=0
    _
  %s6 = ssub.s32 1, %s4
  %s7 = scalar_select 0, %s6, %s4
  $region1: #{tpu_custom_call.1} parent=0
    #allocation2 [shape = 'u8[512]{0}', space=vmem, size = 0x400, scoped, tag = 'output window, operand 0, single buffered']
    #allocation3 [shape = 's32[1]{0}', space=sflag, size = 0x4, scoped, tag = 'scoped memory for tpu_custom_call.1']
    %8 = vsyncpa [#allocation3], 0
    // Predicated region
    $region2: #{tpu_custom_call.1} parent=1 // pred_check
      _
    $region3: #{tpu_custom_call.1} parent=1 // pred_check_branch
      %10 = sbr.rel (0) target = $region5
    $region4: #{tpu_custom_call.1} parent=1 // pred_region
      _
    $region5: #{tpu_custom_call.1} parent=1 // pred_fallthru
      _
    // Predicated region
    $region6: #{tpu_custom_call.1} parent=1 // pred_check
      _
    $region7: #{tpu_custom_call.1} parent=1 // pred_check_branch
      %12 = sbr.rel (0) target = $region9
    $region8: #{tpu_custom_call.1} parent=1 // pred_region
      _
    $region9: #{tpu_custom_call.1} parent=1 // pred_fallthru
      _
    // Predicated region
    $region10: #{tpu_custom_call.1} parent=1 // pred_check
      _
    $region11: #{tpu_custom_call.1} parent=1 // pred_check_branch
      %14 = sbr.rel (0) target = $region13
    $region12: #{tpu_custom_call.1} parent=1 // pred_region
      _
    $region13: #{tpu_custom_call.1} parent=1 // pred_fallthru
      _
    %v15 = vld [vmem:[%s0] sm:$0xff]
    %v16 = vld [vmem:[%s0 + $0x8] sm:$0xff]
    %v17 = vld [vmem:[%s0 + $0x10] sm:$0xff]
    %v18 = vld [vmem:[%s0 + $0x18] sm:$0xff]
    %v19 = vld [vmem:[%s0 + $0x20] sm:$0xff]
    %v20 = vld [vmem:[%s0 + $0x28] sm:$0xff]
    %v21 = vld [vmem:[%s0 + $0x30] sm:$0xff]
    %v22 = vld [vmem:[%s0 + $0x38] sm:$0xff]
    %v23 = vld [vmem:[%s0 + $0x40] sm:$0xff]
    %v24 = vld [vmem:[%s0 + $0x48] sm:$0xff]
    %v25 = vld [vmem:[%s0 + $0x50] sm:$0xff]
    %v26 = vld [vmem:[%s0 + $0x58] sm:$0xff]
    %v27 = vld [vmem:[%s0 + $0x60] sm:$0xff]
    %v28 = vld [vmem:[%s0 + $0x68] sm:$0xff]
    %v29 = vld [vmem:[%s0 + $0x70] sm:$0xff]
    %v30 = vld [vmem:[%s0 + $0x78] sm:$0xff]
    %v31 = vld [vmem:[%s1] sm:$0xff]
    %v32 = vld [vmem:[%s1 + $0x8] sm:$0x7]
    %v33 = vld [vmem:[%s1 + $0x10] sm:$0xff]
    %v34 = vld [vmem:[%s1 + $0x18] sm:$0xff]
    %v35 = vld [vmem:[%s1 + $0x20] sm:$0xff]
    %v36 = vld [vmem:[%s1 + $0x28] sm:$0xff]
    %v37 = vld [vmem:[%s1 + $0x30] sm:$0xff]
    %v38 = vld [vmem:[%s1 + $0x38] sm:$0xff]
    %v39 = vld [vmem:[%s1 + $0x40] sm:$0xff]
    %v40 = vld [vmem:[%s1 + $0x48] sm:$0xff]
    %v41 = vld [vmem:[%s1 + $0x50] sm:$0x1]
    %v42 = vld [vmem:[%s2] sm:$0x1]
    %v43 = vld [vmem:[%s2 + $0x1] sm:$0x1]
    %v44 = vld [vmem:[%s2 + $0x2] sm:$0x1]
    %v45 = vlaneseq
    %v46 = vshrl.u32 %v45, 7
    %v47 = vsub.s32 0, %v46
    %v48 = vrot.slane %v42, %v47
    %vm49 = vcmask 89088
    %v51 = vsel %vm49, %v15, 0
    %v54 = vsel %vm49, %v16, 0
    %v57 = vsel %vm49, %v17, 0
    %v60 = vsel %vm49, %v18, 0
    %v63 = vsel %vm49, %v19, 0
    %v66 = vsel %vm49, %v20, 0
    %v69 = vsel %vm49, %v21, 0
    %v72 = vsel %vm49, %v22, 0
    %v75 = vsel %vm49, %v23, 0
    %v78 = vsel %vm49, %v24, 0
    %v81 = vsel %vm49, %v25, 0
    %v84 = vsel %vm49, %v26, 0
    %v87 = vsel %vm49, %v27, 0
    %v90 = vsel %vm49, %v28, 0
    %v93 = vsel %vm49, %v29, 0
    %v96 = vsel %vm49, %v30, 0
    %vm98 = vcmask 1042432
    %v100 = vsel %vm98, %v32, 0
    %102 = vmatprep.subr.mxu0 0.0
    %103 = vmatpush1.msra.mxu0 %v31
    %104 = vmatprep.subr.mxu0 0.0
    %105 = vmatpush1.msra.mxu0 %v100
    %106 = vmatprep.subr.mxu0 0.0
    %107 = vmatpush1.msra.mxu0 0.0
    %108 = vmatprep.subr.mxu0 0.0
    %109 = vmatpush1.msra.mxu0 0.0
    %110 = vmatprep.subr.mxu0 0.0
    %111 = vmatpush1.msra.mxu0 0.0
    %112 = vmatprep.subr.mxu0 0.0
    %113 = vmatpush1.msra.mxu0 0.0
    %114 = vmatprep.subr.mxu0 0.0
    %115 = vmatpush1.msra.mxu0 0.0
    %116 = vmatprep.subr.mxu0 0.0
    %117 = vmatpush1.msra.mxu0 0.0
    %118 = vmatprep.subr.mxu0 0.0
    %119 = vmatpush1.msra.mxu0 0.0
    %120 = vmatprep.subr.mxu0 0.0
    %121 = vmatpush1.msra.mxu0 0.0
    %122 = vmatprep.subr.mxu0 0.0
    %123 = vmatpush1.msra.mxu0 0.0
    %124 = vmatprep.subr.mxu0 0.0
    %125 = vmatpush1.msra.mxu0 0.0
    %126 = vmatprep.subr.mxu0 0.0
    %127 = vmatpush1.msra.mxu0 0.0
    %128 = vmatprep.subr.mxu0 0.0
    %129 = vmatpush1.msra.mxu0 0.0
    %130 = vmatprep.subr.mxu0 0.0
    %131 = vmatpush1.msra.mxu0 0.0
    %132 = vmatprep.subr.mxu0 0.0
    %133 = vmatpush1.msra.mxu0 0.0
    %134 = vmatprep.subr.mxu0 0.0
    %135 = vmatpush1.msra.mxu0 0.0
    %136 = vmatprep.subr.mxu0 0.0
    %137 = vmatpush1.msra.mxu0 0.0
    %138 = vmatprep.subr.mxu0 0.0
    %139 = vmatpush1.msra.mxu0 0.0
    %140 = vmatprep.subr.mxu0 0.0
    %141 = vmatpush1.msra.mxu0 0.0
    %142 = vmatprep.subr.mxu0 0.0
    %143 = vmatpush1.msra.mxu0 0.0
    %144 = vmatprep.subr.mxu0 0.0
    %145 = vmatpush1.msra.mxu0 0.0
    %146 = vmatprep.subr.mxu0 0.0
    %147 = vmatpush1.msra.mxu0 0.0
    %148 = vmatprep.subr.mxu0 0.0
    %149 = vmatpush1.msra.mxu0 0.0
    %150 = vmatprep.subr.mxu0 0.0
    %151 = vmatpush1.msra.mxu0 0.0
    %152 = vmatprep.subr.mxu0 0.0
    %153 = vmatpush1.msra.mxu0 0.0
    %154 = vmatprep.subr.mxu0 0.0
    %155 = vmatpush1.msra.mxu0 0.0
    %156 = vmatprep.subr.mxu0 0.0
    %157 = vmatpush1.msra.mxu0 0.0
    %158 = vmatprep.subr.mxu0 0.0
    %159 = vmatpush1.msra.mxu0 0.0
    %160 = vmatprep.subr.mxu0 0.0
    %161 = vmatpush1.msra.mxu0 0.0
    %162 = vmatprep.subr.mxu0 0.0
    %163 = vmatpush1.msra.mxu0 0.0
    %164 = vmatprep.subr.mxu0 0.0
    %165 = vmatpush1.msra.mxu0 0.0
    %166 = vmatprep.mubr.f32.mxu0 0.0
    %167 = vmatmul.mubr.f32.gmra.mrb[0].mxu0 %v51
    %v168 = vpop.f32.mrb[0].mxu0
    %v169 = vadd.f32 %v48, %v168
    %v170 = vpop.f32.mrb[0].mxu0
    %171 = vmatprep.mubr.f32.mxu0 0.0
    %172 = vmatmul.mubr.f32.gmra.mrb[0].mxu0 %v54
    %v173 = vpop.f32.mrb[0].mxu0
    %v174 = vadd.f32 %v48, %v173
    %v175 = vpop.f32.mrb[0].mxu0
    %176 = vmatprep.mubr.f32.mxu0 0.0
    %177 = vmatmul.mubr.f32.gmra.mrb[0].mxu0 %v57
    %v178 = vpop.f32.mrb[0].mxu0
    %v179 = vadd.f32 %v48, %v178
    %v180 = vpop.f32.mrb[0].mxu0
    %181 = vmatprep.mubr.f32.mxu0 0.0
    %182 = vmatmul.mubr.f32.gmra.mrb[0].mxu0 %v60
    %v183 = vpop.f32.mrb[0].mxu0
    %v184 = vadd.f32 %v48, %v183
    %v185 = vpop.f32.mrb[0].mxu0
    %186 = vmatprep.mubr.f32.mxu0 0.0
    %187 = vmatmul.mubr.f32.gmra.mrb[0].mxu0 %v63
    %v188 = vpop.f32.mrb[0].mxu0
    %v189 = vadd.f32 %v48, %v188
    %v190 = vpop.f32.mrb[0].mxu0
    %191 = vmatprep.mubr.f32.mxu0 0.0
    %192 = vmatmul.mubr.f32.gmra.mrb[0].mxu0 %v66
    %v193 = vpop.f32.mrb[0].mxu0
    %v194 = vadd.f32 %v48, %v193
    %v195 = vpop.f32.mrb[0].mxu0
    %196 = vmatprep.mubr.f32.mxu0 0.0
    %197 = vmatmul.mubr.f32.gmra.mrb[0].mxu0 %v69
    %v198 = vpop.f32.mrb[0].mxu0
    %v199 = vadd.f32 %v48, %v198
    %v200 = vpop.f32.mrb[0].mxu0
    %201 = vmatprep.mubr.f32.mxu0 0.0
    %202 = vmatmul.mubr.f32.gmra.mrb[0].mxu0 %v72
    %v203 = vpop.f32.mrb[0].mxu0
    %v204 = vadd.f32 %v48, %v203
    %v205 = vpop.f32.mrb[0].mxu0
    %206 = vmatprep.mubr.f32.mxu0 0.0
    %207 = vmatmul.mubr.f32.gmra.mrb[0].mxu0 %v75
    %v208 = vpop.f32.mrb[0].mxu0
    %v209 = vadd.f32 %v48, %v208
    %v210 = vpop.f32.mrb[0].mxu0
    %211 = vmatprep.mubr.f32.mxu0 0.0
    %212 = vmatmul.mubr.f32.gmra.mrb[0].mxu0 %v78
    %v213 = vpop.f32.mrb[0].mxu0
    %v214 = vadd.f32 %v48, %v213
    %v215 = vpop.f32.mrb[0].mxu0
    %216 = vmatprep.mubr.f32.mxu0 0.0
    %217 = vmatmul.mubr.f32.gmra.mrb[0].mxu0 %v81
    %v218 = vpop.f32.mrb[0].mxu0
    %v219 = vadd.f32 %v48, %v218
    %v220 = vpop.f32.mrb[0].mxu0
    %221 = vmatprep.mubr.f32.mxu0 0.0
    %222 = vmatmul.mubr.f32.gmra.mrb[0].mxu0 %v84
    %v223 = vpop.f32.mrb[0].mxu0
    %v224 = vadd.f32 %v48, %v223
    %v225 = vpop.f32.mrb[0].mxu0
    %226 = vmatprep.mubr.f32.mxu0 0.0
    %227 = vmatmul.mubr.f32.gmra.mrb[0].mxu0 %v87
    %v228 = vpop.f32.mrb[0].mxu0
    %v229 = vadd.f32 %v48, %v228
    %v230 = vpop.f32.mrb[0].mxu0
    %231 = vmatprep.mubr.f32.mxu0 0.0
    %232 = vmatmul.mubr.f32.gmra.mrb[0].mxu0 %v90
    %v233 = vpop.f32.mrb[0].mxu0
    %v234 = vadd.f32 %v48, %v233
    %v235 = vpop.f32.mrb[0].mxu0
    %236 = vmatprep.mubr.f32.mxu0 0.0
    %237 = vmatmul.mubr.f32.gmra.mrb[0].mxu0 %v93
    %v238 = vpop.f32.mrb[0].mxu0
    %v239 = vadd.f32 %v48, %v238
    %v240 = vpop.f32.mrb[0].mxu0
    %241 = vmatprep.mubr.f32.mxu0 0.0
    %242 = vmatmul.mubr.f32.gmra.mrb[0].mxu0 %v96
    %v243 = vpop.f32.mrb[0].mxu0
    %v244 = vadd.f32 %v48, %v243
    %v245 = vpop.f32.mrb[0].mxu0
    %246 = vdwg.mxu0
    %v247 = vmax.f32 %v169, 0.0
    %v248 = vmax.f32 %v174, 0.0
    %v249 = vmax.f32 %v179, 0.0
    %v250 = vmax.f32 %v184, 0.0
    %v251 = vmax.f32 %v189, 0.0
    %v252 = vmax.f32 %v194, 0.0
    %v253 = vmax.f32 %v199, 0.0
    %v254 = vmax.f32 %v204, 0.0
    %v255 = vmax.f32 %v209, 0.0
    %v256 = vmax.f32 %v214, 0.0
    %v257 = vmax.f32 %v219, 0.0
    %v258 = vmax.f32 %v224, 0.0
    %v259 = vmax.f32 %v229, 0.0
    %v260 = vmax.f32 %v234, 0.0
    %v261 = vmax.f32 %v239, 0.0
    %v262 = vmax.f32 %v244, 0.0
    %v263 = vlaneseq
    %v264 = vshrl.u32 %v263, 7
    %v265 = vsub.s32 0, %v264
    %v266 = vrot.slane %v43, %v265
    %vm267 = vcmask 523264
    %v269 = vsel %vm267, %v247, 0
    %v272 = vsel %vm267, %v248, 0
    %v275 = vsel %vm267, %v249, 0
    %v278 = vsel %vm267, %v250, 0
    %v281 = vsel %vm267, %v251, 0
    %v284 = vsel %vm267, %v252, 0
    %v287 = vsel %vm267, %v253, 0
    %v290 = vsel %vm267, %v254, 0
    %v293 = vsel %vm267, %v255, 0
    %v296 = vsel %vm267, %v256, 0
    %v299 = vsel %vm267, %v257, 0
    %v302 = vsel %vm267, %v258, 0
    %v305 = vsel %vm267, %v259, 0
    %v308 = vsel %vm267, %v260, 0
    %v311 = vsel %vm267, %v261, 0
    %v314 = vsel %vm267, %v262, 0
    %316 = vmatprep.subr.mxu0 0.0
    %317 = vmatpush1.msra.mxu0 %v33
    %318 = vmatprep.subr.mxu0 0.0
    %319 = vmatpush1.msra.mxu0 %v34
    %320 = vmatprep.subr.mxu0 0.0
    %321 = vmatpush1.msra.mxu0 %v35
    %322 = vmatprep.subr.mxu0 0.0
    %323 = vmatpush1.msra.mxu0 %v36
    %324 = vmatprep.subr.mxu0 0.0
    %325 = vmatpush1.msra.mxu0 %v37
    %326 = vmatprep.subr.mxu0 0.0
    %327 = vmatpush1.msra.mxu0 %v38
    %328 = vmatprep.subr.mxu0 0.0
    %329 = vmatpush1.msra.mxu0 %v39
    %330 = vmatprep.subr.mxu0 0.0
    %331 = vmatpush1.msra.mxu0 %v40
    %332 = vmatprep.subr.mxu0 0.0
    %333 = vmatpush1.msra.mxu0 0.0
    %334 = vmatprep.subr.mxu0 0.0
    %335 = vmatpush1.msra.mxu0 0.0
    %336 = vmatprep.subr.mxu0 0.0
    %337 = vmatpush1.msra.mxu0 0.0
    %338 = vmatprep.subr.mxu0 0.0
    %339 = vmatpush1.msra.mxu0 0.0
    %340 = vmatprep.subr.mxu0 0.0
    %341 = vmatpush1.msra.mxu0 0.0
    %342 = vmatprep.subr.mxu0 0.0
    %343 = vmatpush1.msra.mxu0 0.0
    %344 = vmatprep.subr.mxu0 0.0
    %345 = vmatpush1.msra.mxu0 0.0
    %346 = vmatprep.subr.mxu0 0.0
    %347 = vmatpush1.msra.mxu0 0.0
    %348 = vmatprep.subr.mxu0 0.0
    %349 = vmatpush1.msra.mxu0 0.0
    %350 = vmatprep.subr.mxu0 0.0
    %351 = vmatpush1.msra.mxu0 0.0
    %352 = vmatprep.subr.mxu0 0.0
    %353 = vmatpush1.msra.mxu0 0.0
    %354 = vmatprep.subr.mxu0 0.0
    %355 = vmatpush1.msra.mxu0 0.0
    %356 = vmatprep.subr.mxu0 0.0
    %357 = vmatpush1.msra.mxu0 0.0
    %358 = vmatprep.subr.mxu0 0.0
    %359 = vmatpush1.msra.mxu0 0.0
    %360 = vmatprep.subr.mxu0 0.0
    %361 = vmatpush1.msra.mxu0 0.0
    %362 = vmatprep.subr.mxu0 0.0
    %363 = vmatpush1.msra.mxu0 0.0
    %364 = vmatprep.subr.mxu0 0.0
    %365 = vmatpush1.msra.mxu0 0.0
    %366 = vmatprep.subr.mxu0 0.0
    %367 = vmatpush1.msra.mxu0 0.0
    %368 = vmatprep.subr.mxu0 0.0
    %369 = vmatpush1.msra.mxu0 0.0
    %370 = vmatprep.subr.mxu0 0.0
    %371 = vmatpush1.msra.mxu0 0.0
    %372 = vmatprep.subr.mxu0 0.0
    %373 = vmatpush1.msra.mxu0 0.0
    %374 = vmatprep.subr.mxu0 0.0
    %375 = vmatpush1.msra.mxu0 0.0
    %376 = vmatprep.subr.mxu0 0.0
    %377 = vmatpush1.msra.mxu0 0.0
    %378 = vmatprep.subr.mxu0 0.0
    %379 = vmatpush1.msra.mxu0 0.0
    %380 = vmatprep.mubr.f32.mxu0 0.0
    %381 = vmatmul.mubr.f32.gmra.mrb[0].mxu0 %v269
    %v382 = vpop.f32.mrb[0].mxu0
    %v383 = vadd.f32 %v266, %v382
    %v384 = vpop.f32.mrb[0].mxu0
    %385 = vmatprep.mubr.f32.mxu0 0.0
    %386 = vmatmul.mubr.f32.gmra.mrb[0].mxu0 %v272
    %v387 = vpop.f32.mrb[0].mxu0
    %v388 = vadd.f32 %v266, %v387
    %v389 = vpop.f32.mrb[0].mxu0
    %390 = vmatprep.mubr.f32.mxu0 0.0
    %391 = vmatmul.mubr.f32.gmra.mrb[0].mxu0 %v275
    %v392 = vpop.f32.mrb[0].mxu0
    %v393 = vadd.f32 %v266, %v392
    %v394 = vpop.f32.mrb[0].mxu0
    %395 = vmatprep.mubr.f32.mxu0 0.0
    %396 = vmatmul.mubr.f32.gmra.mrb[0].mxu0 %v278
    %v397 = vpop.f32.mrb[0].mxu0
    %v398 = vadd.f32 %v266, %v397
    %v399 = vpop.f32.mrb[0].mxu0
    %400 = vmatprep.mubr.f32.mxu0 0.0
    %401 = vmatmul.mubr.f32.gmra.mrb[0].mxu0 %v281
    %v402 = vpop.f32.mrb[0].mxu0
    %v403 = vadd.f32 %v266, %v402
    %v404 = vpop.f32.mrb[0].mxu0
    %405 = vmatprep.mubr.f32.mxu0 0.0
    %406 = vmatmul.mubr.f32.gmra.mrb[0].mxu0 %v284
    %v407 = vpop.f32.mrb[0].mxu0
    %v408 = vadd.f32 %v266, %v407
    %v409 = vpop.f32.mrb[0].mxu0
    %410 = vmatprep.mubr.f32.mxu0 0.0
    %411 = vmatmul.mubr.f32.gmra.mrb[0].mxu0 %v287
    %v412 = vpop.f32.mrb[0].mxu0
    %v413 = vadd.f32 %v266, %v412
    %v414 = vpop.f32.mrb[0].mxu0
    %415 = vmatprep.mubr.f32.mxu0 0.0
    %416 = vmatmul.mubr.f32.gmra.mrb[0].mxu0 %v290
    %v417 = vpop.f32.mrb[0].mxu0
    %v418 = vadd.f32 %v266, %v417
    %v419 = vpop.f32.mrb[0].mxu0
    %420 = vmatprep.mubr.f32.mxu0 0.0
    %421 = vmatmul.mubr.f32.gmra.mrb[0].mxu0 %v293
    %v422 = vpop.f32.mrb[0].mxu0
    %v423 = vadd.f32 %v266, %v422
    %v424 = vpop.f32.mrb[0].mxu0
    %425 = vmatprep.mubr.f32.mxu0 0.0
    %426 = vmatmul.mubr.f32.gmra.mrb[0].mxu0 %v296
    %v427 = vpop.f32.mrb[0].mxu0
    %v428 = vadd.f32 %v266, %v427
    %v429 = vpop.f32.mrb[0].mxu0
    %430 = vmatprep.mubr.f32.mxu0 0.0
    %431 = vmatmul.mubr.f32.gmra.mrb[0].mxu0 %v299
    %v432 = vpop.f32.mrb[0].mxu0
    %v433 = vadd.f32 %v266, %v432
    %v434 = vpop.f32.mrb[0].mxu0
    %435 = vmatprep.mubr.f32.mxu0 0.0
    %436 = vmatmul.mubr.f32.gmra.mrb[0].mxu0 %v302
    %v437 = vpop.f32.mrb[0].mxu0
    %v438 = vadd.f32 %v266, %v437
    %v439 = vpop.f32.mrb[0].mxu0
    %440 = vmatprep.mubr.f32.mxu0 0.0
    %441 = vmatmul.mubr.f32.gmra.mrb[0].mxu0 %v305
    %v442 = vpop.f32.mrb[0].mxu0
    %v443 = vadd.f32 %v266, %v442
    %v444 = vpop.f32.mrb[0].mxu0
    %445 = vmatprep.mubr.f32.mxu0 0.0
    %446 = vmatmul.mubr.f32.gmra.mrb[0].mxu0 %v308
    %v447 = vpop.f32.mrb[0].mxu0
    %v448 = vadd.f32 %v266, %v447
    %v449 = vpop.f32.mrb[0].mxu0
    %450 = vmatprep.mubr.f32.mxu0 0.0
    %451 = vmatmul.mubr.f32.gmra.mrb[0].mxu0 %v311
    %v452 = vpop.f32.mrb[0].mxu0
    %v453 = vadd.f32 %v266, %v452
    %v454 = vpop.f32.mrb[0].mxu0
    %455 = vmatprep.mubr.f32.mxu0 0.0
    %456 = vmatmul.mubr.f32.gmra.mrb[0].mxu0 %v314
    %v457 = vpop.f32.mrb[0].mxu0
    %v458 = vadd.f32 %v266, %v457
    %v459 = vpop.f32.mrb[0].mxu0
    %460 = vdwg.mxu0
    %v461 = vmax.f32 %v383, 0.0
    %v462 = vmax.f32 %v388, 0.0
    %v463 = vmax.f32 %v393, 0.0
    %v464 = vmax.f32 %v398, 0.0
    %v465 = vmax.f32 %v403, 0.0
    %v466 = vmax.f32 %v408, 0.0
    %v467 = vmax.f32 %v413, 0.0
    %v468 = vmax.f32 %v418, 0.0
    %v469 = vmax.f32 %v423, 0.0
    %v470 = vmax.f32 %v428, 0.0
    %v471 = vmax.f32 %v433, 0.0
    %v472 = vmax.f32 %v438, 0.0
    %v473 = vmax.f32 %v443, 0.0
    %v474 = vmax.f32 %v448, 0.0
    %v475 = vmax.f32 %v453, 0.0
    %v476 = vmax.f32 %v458, 0.0
    %478 = vset.pattern.permute.xlu0 0
    %479 = vperm.xlu0 %478, %v44
    %v480 = vpop.permute.xlu0 %479
    %vm482 = vcmask 261120
    %v484 = vsel %vm482, %v41, 0
    %v487 = vsel %vm482, %v461, 0
    %v490 = vsel %vm482, %v462, 0
    %v493 = vsel %vm482, %v463, 0
    %v496 = vsel %vm482, %v464, 0
    %v499 = vsel %vm482, %v465, 0
    %v502 = vsel %vm482, %v466, 0
    %v505 = vsel %vm482, %v467, 0
    %v508 = vsel %vm482, %v468, 0
    %v511 = vsel %vm482, %v469, 0
    %v514 = vsel %vm482, %v470, 0
    %v517 = vsel %vm482, %v471, 0
    %v520 = vsel %vm482, %v472, 0
    %v523 = vsel %vm482, %v473, 0
    %v526 = vsel %vm482, %v474, 0
    %v529 = vsel %vm482, %v475, 0
    %v532 = vsel %vm482, %v476, 0
    %534 = vmatprep.subr.mxu0 0.0
    %535 = vmatpush1.xpose.msra.mxu0 %v487
    %536 = vmatprep.subr.mxu0 0.0
    %537 = vmatpush1.xpose.msra.mxu0 %v490
    %538 = vmatprep.subr.mxu0 0.0
    %539 = vmatpush1.xpose.msra.mxu0 %v493
    %540 = vmatprep.subr.mxu0 0.0
    %541 = vmatpush1.xpose.msra.mxu0 %v496
    %542 = vmatprep.subr.mxu0 0.0
    %543 = vmatpush1.xpose.msra.mxu0 %v499
    %544 = vmatprep.subr.mxu0 0.0
    %545 = vmatpush1.xpose.msra.mxu0 %v502
    %546 = vmatprep.subr.mxu0 0.0
    %547 = vmatpush1.xpose.msra.mxu0 %v505
    %548 = vmatprep.subr.mxu0 0.0
    %549 = vmatpush1.xpose.msra.mxu0 %v508
    %550 = vmatprep.subr.mxu0 0.0
    %551 = vmatpush1.xpose.msra.mxu0 %v511
    %552 = vmatprep.subr.mxu0 0.0
    %553 = vmatpush1.xpose.msra.mxu0 %v514
    %554 = vmatprep.subr.mxu0 0.0
    %555 = vmatpush1.xpose.msra.mxu0 %v517
    %556 = vmatprep.subr.mxu0 0.0
    %557 = vmatpush1.xpose.msra.mxu0 %v520
    %558 = vmatprep.subr.mxu0 0.0
    %559 = vmatpush1.xpose.msra.mxu0 %v523
    %560 = vmatprep.subr.mxu0 0.0
    %561 = vmatpush1.xpose.msra.mxu0 %v526
    %562 = vmatprep.subr.mxu0 0.0
    %563 = vmatpush1.xpose.msra.mxu0 %v529
    %564 = vmatprep.subr.mxu0 0.0
    %565 = vmatpush1.xpose.msra.mxu0 %v532
    %566 = vmatprep.subr.mxu0 0.0
    %567 = vmatpush1.xpose.msra.mxu0 0.0
    %568 = vmatprep.subr.mxu0 0.0
    %569 = vmatpush1.xpose.msra.mxu0 0.0
    %570 = vmatprep.subr.mxu0 0.0
    %571 = vmatpush1.xpose.msra.mxu0 0.0
    %572 = vmatprep.subr.mxu0 0.0
    %573 = vmatpush1.xpose.msra.mxu0 0.0
    %574 = vmatprep.subr.mxu0 0.0
    %575 = vmatpush1.xpose.msra.mxu0 0.0
    %576 = vmatprep.subr.mxu0 0.0
    %577 = vmatpush1.xpose.msra.mxu0 0.0
    %578 = vmatprep.subr.mxu0 0.0
    %579 = vmatpush1.xpose.msra.mxu0 0.0
    %580 = vmatprep.subr.mxu0 0.0
    %581 = vmatpush1.xpose.msra.mxu0 0.0
    %582 = vmatprep.subr.mxu0 0.0
    %583 = vmatpush1.xpose.msra.mxu0 0.0
    %584 = vmatprep.subr.mxu0 0.0
    %585 = vmatpush1.xpose.msra.mxu0 0.0
    %586 = vmatprep.subr.mxu0 0.0
    %587 = vmatpush1.xpose.msra.mxu0 0.0
    %588 = vmatprep.subr.mxu0 0.0
    %589 = vmatpush1.xpose.msra.mxu0 0.0
    %590 = vmatprep.subr.mxu0 0.0
    %591 = vmatpush1.xpose.msra.mxu0 0.0
    %592 = vmatprep.subr.mxu0 0.0
    %593 = vmatpush1.xpose.msra.mxu0 0.0
    %594 = vmatprep.subr.mxu0 0.0
    %595 = vmatpush1.xpose.msra.mxu0 0.0
    %596 = vmatprep.subr.mxu0 0.0
    %597 = vmatpush1.xpose.msra.mxu0 0.0
    %598 = vmatprep.mubr.f32.mxu0 0.0
    %599 = vmatmul.mubr.f32.gmra.mrb[0].mxu0 %v484
    %v600 = vpop.f32.mrb[0].mxu0
    %v601 = vadd.f32 %v480, %v600
    %v602 = vpop.f32.mrb[0].mxu0
    %603 = vdwg.mxu0
    %604 = vst [vmem:[#allocation2] sm:$0x1] %v601
    // Predicated region
    $region14: #{tpu_custom_call.1} parent=1 // pred_check
      _
    $region15: #{tpu_custom_call.1} parent=1 // pred_check_branch
      %606 = sbr.rel (0) target = $region17
    $region16: #{tpu_custom_call.1} parent=1 // pred_region
      %s608 = ssub.s32 16, 16
      %609 = vsyncadd [#allocation3], %s608
      %s611 = sshll.u32 [#allocation2], 4
      %s612 = int_to_ptr.vmem [resolvable:$true] %s611
      %614 = dma.vmem_to_hbm [thread:$0]  %s612, 16, %s3, [#allocation3]
    $region17: #{tpu_custom_call.1} parent=1 // pred_fallthru
      _
    // Predicated region
    $region18: #{tpu_custom_call.1} parent=1 // pred_check
      _
    $region19: #{tpu_custom_call.1} parent=1 // pred_check_branch
      %616 = sbr.rel (0) target = $region21
    $region20: #{tpu_custom_call.1} parent=1 // pred_region
      %617 = dma.done [#allocation3], 16
    $region21: #{tpu_custom_call.1} parent=1 // pred_fallthru
      _
    %618 = vsyncpa [#allocation3], 1

</llo_original>
